<compile_context>
chip_gen: v7x
topology: tpu7x:2x2x1
jax: 0.10.0
libtpu: 0.0.40
codegen_flags: <defaults>
</compile_context>

<pallas_src>
import functools

import jax
import jax.numpy as jnp
from jax.experimental import pallas as pl
from jax.experimental.pallas import tpu as pltpu


def _round_up(v, m):
    return ((v + m - 1) // m) * m


def _normed_linear_kernel(scale_ref, x_ref, wt_ref, b_ref, o_ref, acc_ref):
    # scale_ref : (1, 1) f32 in SMEM             -- 1 / max(sigma, 1)
    # x_ref     : (tm, tk) activation tile
    # wt_ref    : (tk, tn) pre-transposed weight tile (lane-dense on out_dim)
    # b_ref     : (1, tn)  bias tile
    # o_ref     : (tm, tn) output tile
    # acc_ref   : (tm, tn) f32 accumulator scratch (resident across the K axis)
    k = pl.program_id(2)

    @pl.when(k == 0)
    def _init():
        acc_ref[...] = jnp.zeros_like(acc_ref)

    acc_ref[...] += jnp.dot(
        x_ref[...], wt_ref[...], preferred_element_type=jnp.float32
    )

    @pl.when(k == pl.num_programs(2) - 1)
    def _finalize():
        scale = scale_ref[0, 0]
        o_ref[...] = (
            acc_ref[...] * scale + b_ref[...].astype(jnp.float32)
        ).astype(o_ref.dtype)


def _spectral_norm_sigma(w, iters):
    """Deterministic power iteration for the largest singular value of w."""
    # TODO(synk): torch's spectral_norm caches u/v across calls (1 iteration per
    # forward); carrying persistent u/v from the caller would amortize this prologue.
    w = w.astype(jnp.float32)
    v = jax.random.normal(jax.random.PRNGKey(42), (w.shape[1],), jnp.float32)
    v = v / (jnp.linalg.norm(v) + 1e-12)

    def body(_, v):
        u = w @ v
        u = u / (jnp.linalg.norm(u) + 1e-12)
        v = w.T @ u
        v = v / (jnp.linalg.norm(v) + 1e-12)
        return v

    v = jax.lax.fori_loop(0, iters, body, v)
    return jnp.linalg.norm(w @ v)


@functools.partial(jax.jit, static_argnames=("tm", "tn", "tk", "power_iters"))
def plain_normed_forward(x, weight, bias, *, tm=256, tn=256, tk=512,
                         power_iters=32):
    M, K = x.shape
    N, K2 = weight.shape
    assert K2 == K

    sigma = _spectral_norm_sigma(weight, power_iters)
    # if sigma > 1: divide by sigma, else leave untouched (folded into one scalar).
    scale = jnp.where(sigma > 1.0, 1.0 / sigma, 1.0).astype(jnp.float32)
    scale = scale.reshape(1, 1)

    # Clamp tiles to the (8, 128)-rounded problem so small shapes stay legal
    # without excessive padding; large shapes get real multi-step grids.
    tm_eff = min(tm, _round_up(M, 8))
    tn_eff = min(tn, _round_up(N, 128))
    tk_eff = min(tk, _round_up(K, 128))

    M_pad = _round_up(M, tm_eff)
    N_pad = _round_up(N, tn_eff)
    K_pad = _round_up(K, tk_eff)

    x_p = jnp.pad(x, ((0, M_pad - M), (0, K_pad - K)))
    # Pre-transposed weight (K_pad, N_pad): lane-dense on out_dim, no in-kernel .T.
    wt_p = jnp.pad(weight, ((0, N_pad - N), (0, K_pad - K))).T
    b_p = jnp.pad(bias, (0, N_pad - N)).reshape(1, N_pad)

    grid = (M_pad // tm_eff, N_pad // tn_eff, K_pad // tk_eff)

    x_item = jnp.dtype(x.dtype).itemsize
    w_item = jnp.dtype(weight.dtype).itemsize
    cost = pl.CostEstimate(
        flops=2 * M_pad * N_pad * K_pad,
        transcendentals=0,
        bytes_accessed=(
            x_p.size * x_item * (N_pad // tn_eff)        # x re-streamed per N tile
            + wt_p.size * w_item * (M_pad // tm_eff)     # W re-streamed per M tile
            + b_p.size * jnp.dtype(bias.dtype).itemsize * (M_pad // tm_eff)
            + M_pad * N_pad * x_item                     # output writeback
        ),
    )

    out_p = pl.pallas_call(
        _normed_linear_kernel,
        out_shape=jax.ShapeDtypeStruct((M_pad, N_pad), x.dtype),
        grid=grid,
        in_specs=[
            pl.BlockSpec(memory_space=pltpu.MemorySpace.SMEM),        # scale (1,1)
            pl.BlockSpec((tm_eff, tk_eff), lambda i, j, k: (i, k)),   # x tile
            pl.BlockSpec((tk_eff, tn_eff), lambda i, j, k: (k, j)),   # W^T tile
            pl.BlockSpec((1, tn_eff), lambda i, j, k: (0, j)),        # bias tile
        ],
        out_specs=pl.BlockSpec((tm_eff, tn_eff), lambda i, j, k: (i, j)),
        scratch_shapes=[pltpu.VMEM((tm_eff, tn_eff), jnp.float32)],
        compiler_params=pltpu.CompilerParams(
            dimension_semantics=("parallel", "parallel", "arbitrary"),
        ),
        cost_estimate=cost,
    )(scale, x_p, wt_p, b_p)

    return out_p[:M, :N]


if __name__ == "__main__":
    key = jax.random.PRNGKey(0)
    k_x, k_w, k_b = jax.random.split(key, 3)

    batch, in_dim, out_dim = 8, 32, 16

    # nn.Linear-style init: U(-1/sqrt(in_dim), 1/sqrt(in_dim))
    bound = 1.0 / (in_dim ** 0.5)
    weight0 = jax.random.uniform(k_w, (out_dim, in_dim), jnp.float32, -bound, bound)
    bias = jax.random.uniform(k_b, (out_dim,), jnp.float32, -bound, bound)
    x = jax.random.normal(k_x, (batch, in_dim), jnp.float32)

    # Exercise both branches: sigma > 1 (spectral-normalized) and sigma <= 1 (plain).
    for wmul in (3.0, 0.25):
        weight = weight0 * wmul
        out = jax.block_until_ready(
            plain_normed_forward(x, weight, bias, power_iters=200))

        # Pure-JAX reference of the module semantics (exact spectral norm).
        sigma_ref = jnp.linalg.norm(weight, ord=2)
        w_eff = jnp.where(sigma_ref > 1.0, weight / sigma_ref, weight)
        ref = x @ w_eff.T + bias

        assert out.shape == (batch, out_dim)
        assert jnp.allclose(out, ref, atol=1e-3, rtol=1e-3), (
            f"mismatch for weight multiplier {wmul}")

    print("KERNEL_OK")
</pallas_src>

<mosaic_0001>
module attributes {stable_mosaic.version = 11 : i64} {
  func.func @_normed_linear_kernel(%arg0: i32, %arg1: i32, %arg2: i32, %arg3: memref<1x1xf32, #tpu.memory_space<smem>>, %arg4: memref<8x128xf32, #tpu.memory_space<vmem>>, %arg5: memref<128x128xf32, #tpu.memory_space<vmem>>, %arg6: memref<1x128xf32, #tpu.memory_space<vmem>>, %arg7: memref<8x128xf32, #tpu.memory_space<vmem>>, %arg8: memref<8x128xf32, #tpu.memory_space<vmem>>) attributes {dimension_semantics = [#tpu.dimension_semantics<parallel>, #tpu.dimension_semantics<parallel>, #tpu.dimension_semantics<arbitrary>], iteration_bounds = array<i64: 1, 1, 1>, scalar_prefetch = 0 : i64, scratch_operands = 1 : i64, tpu.core_type = #tpu.core_type<tc>, window_params = [{transform_indices = @transform_0, window_bounds = array<i64: 1, 1>}, {transform_indices = @transform_1, window_bounds = array<i64: 8, 128>}, {transform_indices = @transform_2, window_bounds = array<i64: 128, 128>}, {transform_indices = @transform_3, window_bounds = array<i64: 1, 128>}, {transform_indices = @transform_4, window_bounds = array<i64: 8, 128>}]} {
    %c0_i32 = arith.constant 0 : i32
    %0 = arith.cmpi eq, %arg2, %c0_i32 : i32
    %1 = arith.extui %0 : i1 to i32
    %c0_i32_0 = arith.constant 0 : i32
    %2 = arith.cmpi ne, %1, %c0_i32_0 : i32
    scf.if %2 {
      %cst_10 = arith.constant 0.000000e+00 : f32
      %12 = vector.broadcast %cst_10 : f32 to vector<8x128xf32>
      %c0_11 = arith.constant 0 : index
      %c0_12 = arith.constant 0 : index
      %13 = vector.load %arg8[%c0_11, %c0_12] : memref<8x128xf32, #tpu.memory_space<vmem>>, vector<8x128xf32>
      tpu.vector_store %arg8[%c0_11, %c0_12], %12 {strides = array<i32>} : memref<8x128xf32, #tpu.memory_space<vmem>>, vector<8x128xf32>,
    } else {
    }
    %c0 = arith.constant 0 : index
    %c0_1 = arith.constant 0 : index
    %3 = vector.load %arg8[%c0, %c0_1] : memref<8x128xf32, #tpu.memory_space<vmem>>, vector<8x128xf32>
    %c0_2 = arith.constant 0 : index
    %c0_3 = arith.constant 0 : index
    %4 = vector.load %arg4[%c0_2, %c0_3] : memref<8x128xf32, #tpu.memory_space<vmem>>, vector<8x128xf32>
    %c0_4 = arith.constant 0 : index
    %c0_5 = arith.constant 0 : index
    %5 = vector.load %arg5[%c0_4, %c0_5] : memref<128x128xf32, #tpu.memory_space<vmem>>, vector<128x128xf32>
    %cst = arith.constant dense<0.000000e+00> : vector<8x128xf32>
    %6 = tpu.matmul %4, %5, %cst {dimension_numbers = #tpu.dot_dimension_numbers<[1], [0], [0], [1], [0, 0, 1, 1], [], []>} : vector<8x128xf32>, vector<128x128xf32>, vector<8x128xf32> -> vector<8x128xf32>
    %7 = arith.addf %3, %6 : vector<8x128xf32>
    %c0_6 = arith.constant 0 : index
    %c0_7 = arith.constant 0 : index
    %8 = vector.load %arg8[%c0_6, %c0_7] : memref<8x128xf32, #tpu.memory_space<vmem>>, vector<8x128xf32>
    tpu.vector_store %arg8[%c0_6, %c0_7], %7 {strides = array<i32>} : memref<8x128xf32, #tpu.memory_space<vmem>>, vector<8x128xf32>,
    %c0_i32_8 = arith.constant 0 : i32
    %9 = arith.cmpi eq, %arg2, %c0_i32_8 : i32
    %10 = arith.extui %9 : i1 to i32
    %c0_i32_9 = arith.constant 0 : i32
    %11 = arith.cmpi ne, %10, %c0_i32_9 : i32
    scf.if %11 {
      %c0_10 = arith.constant 0 : index
      %c0_11 = arith.constant 0 : index
      %12 = memref.load %arg3[%c0_10, %c0_11] : memref<1x1xf32, #tpu.memory_space<smem>>
      %c0_12 = arith.constant 0 : index
      %c0_13 = arith.constant 0 : index
      %13 = vector.load %arg8[%c0_12, %c0_13] : memref<8x128xf32, #tpu.memory_space<vmem>>, vector<8x128xf32>
      %14 = vector.broadcast %12 : f32 to vector<8x128xf32>
      %15 = arith.mulf %13, %14 : vector<8x128xf32>
      %c0_14 = arith.constant 0 : index
      %c0_15 = arith.constant 0 : index
      %16 = vector.load %arg6[%c0_14, %c0_15] : memref<1x128xf32, #tpu.memory_space<vmem>>, vector<1x128xf32>
      %17 = vector.broadcast %16 : vector<1x128xf32> to vector<8x128xf32>
      %18 = arith.addf %15, %17 : vector<8x128xf32>
      %c0_16 = arith.constant 0 : index
      %c0_17 = arith.constant 0 : index
      %19 = vector.load %arg7[%c0_16, %c0_17] : memref<8x128xf32, #tpu.memory_space<vmem>>, vector<8x128xf32>
      tpu.vector_store %arg7[%c0_16, %c0_17], %18 {strides = array<i32>} : memref<8x128xf32, #tpu.memory_space<vmem>>, vector<8x128xf32>,
    } else {
    }
    return
  }
  func.func @transform_0(%arg0: i32, %arg1: i32, %arg2: i32) -> (i32, i32) {
    %c0_i32 = arith.constant 0 : i32
    %c0_i32_0 = arith.constant 0 : i32
    %c0_i32_1 = arith.constant 0 : i32
    return %c0_i32, %c0_i32_0 : i32, i32
  }
  func.func @transform_1(%arg0: i32, %arg1: i32, %arg2: i32) -> (i32, i32) {
    %c0_i32 = arith.constant 0 : i32
    return %arg0, %arg2 : i32, i32
  }
  func.func @transform_2(%arg0: i32, %arg1: i32, %arg2: i32) -> (i32, i32) {
    %c0_i32 = arith.constant 0 : i32
    return %arg2, %arg1 : i32, i32
  }
  func.func @transform_3(%arg0: i32, %arg1: i32, %arg2: i32) -> (i32, i32) {
    %c0_i32 = arith.constant 0 : i32
    %c0_i32_0 = arith.constant 0 : i32
    return %c0_i32, %arg1 : i32, i32
  }
  func.func @transform_4(%arg0: i32, %arg1: i32, %arg2: i32) -> (i32, i32) {
    %c0_i32 = arith.constant 0 : i32
    return %arg0, %arg1 : i32, i32
  }
}

</mosaic_0001>

<llo_original>
// kernel: plain_normed_forward.1
$region0: #{plain_normed_forward.1}
  #allocation0 [shape = 'u32[]', space=smem, size = 0x4, offset = 0x4, fixed_abs, tag = 'smem constant byte address 0x4 - core index']
  #allocation1 [shape = 'u32[144,128]{1,0:T(1,128)}', space=vmem, size = 0x12000, scoped, tag = 'internal scratch']
  #allocation2 [shape = 'f32[8,128]{1,0:T(8,128)}', space=vmem, size = 0x1000, scoped, tag = 'scratch operand']
  #allocation3 [shape = 'f32[1,1]{1,0:T(1,128)S(6)}', space=smem, size = 0x200, scoped, tag = 'scoped memory for plain_normed_forward.1']
  %s0 = inlined_call_operand.<no memory space> [shape: f32[1,1], index: 0, kind: input, shape index: {}]
  %s1 = inlined_call_operand.vmem [shape: f32[8,128], index: 1, kind: input, shape index: {}]
  %s2 = inlined_call_operand.vmem [shape: f32[128,128], index: 2, kind: input, shape index: {}]
  %s3 = inlined_call_operand.vmem [shape: f32[1,128], index: 3, kind: input, shape index: {}]
  %s4 = inlined_call_operand.hbm [shape: f32[8,128], index: 4, kind: output, shape index: {}]
  %s5 = sld [smem:[#allocation0]]
  $region34: #{plain_normed_forward.1} parent=0
    _
  %s7 = ssub.s32 1, %s5
  %s8 = scalar_select 0, %s7, %s5
  %9 = sst [smem:[#allocation3]] %s0
  $region1: #{plain_normed_forward.1} parent=0
    #allocation4 [shape = 'u8[4096]{0}', space=vmem, size = 0x1000, scoped, tag = 'output window, operand 0, single buffered']
    #allocation5 [shape = 's32[1]{0}', space=sflag, size = 0x4, scoped, tag = 'scoped memory for plain_normed_forward.1']
    %10 = vsyncpa [#allocation5], 0
    // Predicated region
    $region2: #{plain_normed_forward.1} parent=1 // pred_check
      _
    $region3: #{plain_normed_forward.1} parent=1 // pred_check_branch
      %12 = sbr.rel (0) target = $region5
    $region4: #{plain_normed_forward.1} parent=1 // pred_region
      _
    $region5: #{plain_normed_forward.1} parent=1 // pred_fallthru
      _
    // Predicated region
    $region6: #{plain_normed_forward.1} parent=1 // pred_check
      _
    $region7: #{plain_normed_forward.1} parent=1 // pred_check_branch
      %14 = sbr.rel (0) target = $region9
    $region8: #{plain_normed_forward.1} parent=1 // pred_region
      _
    $region9: #{plain_normed_forward.1} parent=1 // pred_fallthru
      _
    // Predicated region
    $region10: #{plain_normed_forward.1} parent=1 // pred_check
      _
    $region11: #{plain_normed_forward.1} parent=1 // pred_check_branch
      %16 = sbr.rel (0) target = $region13
    $region12: #{plain_normed_forward.1} parent=1 // pred_region
      _
    $region13: #{plain_normed_forward.1} parent=1 // pred_fallthru
      _
    // Predicated region
    $region14: #{plain_normed_forward.1} parent=1 // pred_check
      _
    $region15: #{plain_normed_forward.1} parent=1 // pred_check_branch
      %18 = sbr.rel (0) target = $region17
    $region16: #{plain_normed_forward.1} parent=1 // pred_region
      _
    $region17: #{plain_normed_forward.1} parent=1 // pred_fallthru
      _
    %p19 = scmp.eq.s32.totalorder 0, 0
    // Predicated region
    $region18: #{plain_normed_forward.1} parent=1 // pred_check
      %p20 = pneg %p19
    $region19: #{plain_normed_forward.1} parent=1 // pred_check_branch
      %22 = sbr.rel (%p20) target = $region21
    $region20: #{plain_normed_forward.1} parent=1 // pred_region
      %23 = vst [vmem:[#allocation2] sm:$0xff] 0.0
    $region21: #{plain_normed_forward.1} parent=1 // pred_fallthru
      _
    %v24 = vld [vmem:[#allocation2] sm:$0xff]
    %v25 = vld [vmem:[%s1] sm:$0xff]
    %v26 = vld [vmem:[%s2] sm:$0xff]
    %v27 = vld [vmem:[%s2 + $0x8] sm:$0xff]
    %v28 = vld [vmem:[%s2 + $0x10] sm:$0xff]
    %v29 = vld [vmem:[%s2 + $0x18] sm:$0xff]
    %v30 = vld [vmem:[%s2 + $0x20] sm:$0xff]
    %v31 = vld [vmem:[%s2 + $0x28] sm:$0xff]
    %v32 = vld [vmem:[%s2 + $0x30] sm:$0xff]
    %v33 = vld [vmem:[%s2 + $0x38] sm:$0xff]
    %v34 = vld [vmem:[%s2 + $0x40] sm:$0xff]
    %v35 = vld [vmem:[%s2 + $0x48] sm:$0xff]
    %v36 = vld [vmem:[%s2 + $0x50] sm:$0xff]
    %v37 = vld [vmem:[%s2 + $0x58] sm:$0xff]
    %v38 = vld [vmem:[%s2 + $0x60] sm:$0xff]
    %v39 = vld [vmem:[%s2 + $0x68] sm:$0xff]
    %v40 = vld [vmem:[%s2 + $0x70] sm:$0xff]
    %v41 = vld [vmem:[%s2 + $0x78] sm:$0xff]
    %42 = vmatprep.subr.mxu0 0.0
    %43 = vmatpush1.msra.mxu0 %v26
    %44 = vmatprep.subr.mxu0 0.0
    %45 = vmatpush1.msra.mxu0 %v27
    %46 = vmatprep.subr.mxu0 0.0
    %47 = vmatpush1.msra.mxu0 %v28
    %48 = vmatprep.subr.mxu0 0.0
    %49 = vmatpush1.msra.mxu0 %v29
    %50 = vmatprep.subr.mxu0 0.0
    %51 = vmatpush1.msra.mxu0 %v30
    %52 = vmatprep.subr.mxu0 0.0
    %53 = vmatpush1.msra.mxu0 %v31
    %54 = vmatprep.subr.mxu0 0.0
    %55 = vmatpush1.msra.mxu0 %v32
    %56 = vmatprep.subr.mxu0 0.0
    %57 = vmatpush1.msra.mxu0 %v33
    %58 = vmatprep.subr.mxu0 0.0
    %59 = vmatpush1.msra.mxu0 %v34
    %60 = vmatprep.subr.mxu0 0.0
    %61 = vmatpush1.msra.mxu0 %v35
    %62 = vmatprep.subr.mxu0 0.0
    %63 = vmatpush1.msra.mxu0 %v36
    %64 = vmatprep.subr.mxu0 0.0
    %65 = vmatpush1.msra.mxu0 %v37
    %66 = vmatprep.subr.mxu0 0.0
    %67 = vmatpush1.msra.mxu0 %v38
    %68 = vmatprep.subr.mxu0 0.0
    %69 = vmatpush1.msra.mxu0 %v39
    %70 = vmatprep.subr.mxu0 0.0
    %71 = vmatpush1.msra.mxu0 %v40
    %72 = vmatprep.subr.mxu0 0.0
    %73 = vmatpush1.msra.mxu0 %v41
    %74 = vmatprep.subr.mxu0 0.0
    %75 = vmatpush1.msra.mxu0 0.0
    %76 = vmatprep.subr.mxu0 0.0
    %77 = vmatpush1.msra.mxu0 0.0
    %78 = vmatprep.subr.mxu0 0.0
    %79 = vmatpush1.msra.mxu0 0.0
    %80 = vmatprep.subr.mxu0 0.0
    %81 = vmatpush1.msra.mxu0 0.0
    %82 = vmatprep.subr.mxu0 0.0
    %83 = vmatpush1.msra.mxu0 0.0
    %84 = vmatprep.subr.mxu0 0.0
    %85 = vmatpush1.msra.mxu0 0.0
    %86 = vmatprep.subr.mxu0 0.0
    %87 = vmatpush1.msra.mxu0 0.0
    %88 = vmatprep.subr.mxu0 0.0
    %89 = vmatpush1.msra.mxu0 0.0
    %90 = vmatprep.subr.mxu0 0.0
    %91 = vmatpush1.msra.mxu0 0.0
    %92 = vmatprep.subr.mxu0 0.0
    %93 = vmatpush1.msra.mxu0 0.0
    %94 = vmatprep.subr.mxu0 0.0
    %95 = vmatpush1.msra.mxu0 0.0
    %96 = vmatprep.subr.mxu0 0.0
    %97 = vmatpush1.msra.mxu0 0.0
    %98 = vmatprep.subr.mxu0 0.0
    %99 = vmatpush1.msra.mxu0 0.0
    %100 = vmatprep.subr.mxu0 0.0
    %101 = vmatpush1.msra.mxu0 0.0
    %102 = vmatprep.subr.mxu0 0.0
    %103 = vmatpush1.msra.mxu0 0.0
    %104 = vmatprep.subr.mxu0 0.0
    %105 = vmatpush1.msra.mxu0 0.0
    %106 = vmatprep.mubr.f32.mxu0 0.0
    %107 = vmatmul.mubr.f32.gmra.mrb[0].mxu0 %v25
    %v108 = vpop.f32.mrb[0].mxu0
    %v109 = vadd.f32 0.0, %v108
    %v110 = vpop.f32.mrb[0].mxu0
    %111 = vdwg.mxu0
    %v112 = vadd.f32 %v24, %v109
    %113 = vst [vmem:[#allocation2] sm:$0xff] %v112
    // Predicated region
    $region22: #{plain_normed_forward.1} parent=1 // pred_check
      %p114 = pneg %p19
    $region23: #{plain_normed_forward.1} parent=1 // pred_check_branch
      %116 = sbr.rel (%p114) target = $region25
    $region24: #{plain_normed_forward.1} parent=1 // pred_region
      %s117 = sld [smem:[#allocation3]]
      %v118 = vld [vmem:[#allocation2] sm:$0xff]
      %v119 = vstv %s117
      %v120 = vmul.f32 %v118, %v119
      %v121 = vld [vmem:[%s3] sm:$0x1]
      %v123 = vlaneseq
      %v124 = vshrl.u32 %v123, 7
      %v125 = vsub.s32 0, %v124
      %v126 = vrot.slane %v121, %v125
      %v128 = vadd.f32 %v120, %v126
      %129 = vst [vmem:[#allocation4] sm:$0xff] %v128
    $region25: #{plain_normed_forward.1} parent=1 // pred_fallthru
      _
    // Predicated region
    $region26: #{plain_normed_forward.1} parent=1 // pred_check
      _
    $region27: #{plain_normed_forward.1} parent=1 // pred_check_branch
      %131 = sbr.rel (0) target = $region29
    $region28: #{plain_normed_forward.1} parent=1 // pred_region
      %s133 = ssub.s32 128, 128
      %134 = vsyncadd [#allocation5], %s133
      %s136 = sshll.u32 [#allocation4], 4
      %s137 = int_to_ptr.vmem [resolvable:$true] %s136
      %139 = dma.vmem_to_hbm [thread:$0]  %s137, 128, %s4, [#allocation5]
    $region29: #{plain_normed_forward.1} parent=1 // pred_fallthru
      _
    // Predicated region
    $region30: #{plain_normed_forward.1} parent=1 // pred_check
      _
    $region31: #{plain_normed_forward.1} parent=1 // pred_check_branch
      %141 = sbr.rel (0) target = $region33
    $region32: #{plain_normed_forward.1} parent=1 // pred_region
      %142 = dma.done [#allocation5], 128
    $region33: #{plain_normed_forward.1} parent=1 // pred_fallthru
      _
    %143 = vsyncpa [#allocation5], 1

</llo_original>
